<compile_context>
chip_gen: v5e
topology: v5e:2x2
jax: 0.10.0
libtpu: 0.0.40
codegen_flags: <defaults>
</compile_context>

<pallas_src>
import math
import functools

import jax
import jax.numpy as jnp
from jax import lax
from jax.experimental import pallas as pl
from jax.experimental.pallas import tpu as pltpu


def _round_up(a, m):
    return ((a + m - 1) // m) * m


def _classifier_kernel(has_bias, has_scale, x_ref, w_ref, *rest):
    # x_ref: (tm, tk)   w_ref: (tn, tk)   [b_ref: (1, tn)]   [s_ref: (1, tn)]
    # o_ref: (tm, tn)   acc_ref: (tm, tn) f32 scratch
    idx = 0
    b_ref = None
    s_ref = None
    if has_bias:
        b_ref = rest[idx]
        idx += 1
    if has_scale:
        s_ref = rest[idx]
        idx += 1
    o_ref = rest[idx]
    acc_ref = rest[idx + 1]

    k = pl.program_id(2)

    @pl.when(k == 0)
    def _():
        acc_ref[...] = jnp.zeros_like(acc_ref)

    # Contract the shared last dim: X (tm, tk) against W (tn, tk) -> (tm, tn) on the MXU,
    # accumulating in f32 (no pre-transposed weight needed).
    acc_ref[...] += lax.dot_general(
        x_ref[...], w_ref[...],
        dimension_numbers=(((1,), (1,)), ((), ())),
        preferred_element_type=jnp.float32)

    @pl.when(k == pl.num_programs(2) - 1)
    def _():
        out = acc_ref[...]
        if has_bias:
            out = out + b_ref[...].astype(jnp.float32)   # F.linear bias, broadcast over rows
        if has_scale:
            out = out * s_ref[...].astype(jnp.float32)   # learnable per-class scale
        o_ref[...] = out.astype(o_ref.dtype)


def dot_product_classifier(x, weight, bias=None, scales=None, *,
                           tm=256, tn=256, tk=512,
                           vmem_limit_bytes=32 * 1024 * 1024):
    """Forward pass of DotProductClassifier.

    x:       (N, in_dim)
    weight:  (num_classes, in_dim)   -- PyTorch nn.Linear-style layout (NOT transposed)
    bias:    (num_classes,) or None
    scales:  (num_classes,) or None
    returns: (N, num_classes)
    """
    n, kdim = x.shape
    c, kw = weight.shape
    assert kw == kdim, "weight last dim must match x last dim"

    has_bias = bias is not None
    has_scale = scales is not None

    # Tile sizes: clamp to the (hardware-aligned) problem size, keep (8, 128) alignment.
    tm = _round_up(min(tm, _round_up(n, 8)), 8)
    tn = _round_up(min(tn, _round_up(c, 128)), 128)
    tk = _round_up(min(tk, _round_up(kdim, 128)), 128)

    n_p = _round_up(n, tm)
    c_p = _round_up(c, tn)
    k_p = _round_up(kdim, tk)

    xp = x if (n_p == n and k_p == kdim) else jnp.pad(x, ((0, n_p - n), (0, k_p - kdim)))
    wp = weight if (c_p == c and k_p == kdim) else jnp.pad(
        weight, ((0, c_p - c), (0, k_p - kdim)))

    operands = [xp, wp]
    in_specs = [
        pl.BlockSpec((tm, tk), lambda i, j, kk: (i, kk)),   # X tile
        pl.BlockSpec((tn, tk), lambda i, j, kk: (j, kk)),   # W tile (PyTorch layout)
    ]
    if has_bias:
        bp = bias.reshape(1, c)
        if c_p != c:
            bp = jnp.pad(bp, ((0, 0), (0, c_p - c)))
        operands.append(bp)
        in_specs.append(pl.BlockSpec((1, tn), lambda i, j, kk: (0, j)))
    if has_scale:
        sp = scales.reshape(1, c)
        if c_p != c:
            sp = jnp.pad(sp, ((0, 0), (0, c_p - c)))
        operands.append(sp)
        in_specs.append(pl.BlockSpec((1, tn), lambda i, j, kk: (0, j)))

    grid = (n_p // tm, c_p // tn, k_p // tk)

    itemsize = jnp.dtype(x.dtype).itemsize
    cost = pl.CostEstimate(
        flops=2 * n * kdim * c,
        transcendentals=0,
        bytes_accessed=(n * kdim + c * kdim + n * c) * itemsize)

    out_p = pl.pallas_call(
        functools.partial(_classifier_kernel, has_bias, has_scale),
        out_shape=jax.ShapeDtypeStruct((n_p, c_p), x.dtype),
        grid_spec=pltpu.PrefetchScalarGridSpec(
            num_scalar_prefetch=0,
            grid=grid,
            in_specs=in_specs,
            out_specs=pl.BlockSpec((tm, tn), lambda i, j, kk: (i, j)),
            scratch_shapes=[pltpu.VMEM((tm, tn), jnp.float32)],
        ),
        compiler_params=pltpu.CompilerParams(
            dimension_semantics=("parallel", "parallel", "arbitrary"),
            vmem_limit_bytes=vmem_limit_bytes),
        cost_estimate=cost,
    )(*operands)

    if (n_p, c_p) != (n, c):
        out_p = out_p[:n, :c]
    return out_p


def init_params(key, in_dim, num_classes, bias=True, learnable_scale=False,
                dtype=jnp.float32):
    """Deterministic re-implementation of DotProductClassifier.reset_parameters()."""
    kw, kb = jax.random.split(key)
    # kaiming_uniform_(weight, a=sqrt(5)) with fan_in = in_dim
    # gain = sqrt(2 / (1 + a^2)) = sqrt(1/3); bound = gain * sqrt(3 / fan_in) = 1/sqrt(fan_in)
    w_bound = 1.0 / math.sqrt(in_dim)
    weight = jax.random.uniform(kw, (num_classes, in_dim), dtype,
                                minval=-w_bound, maxval=w_bound)
    b = None
    if bias:
        b_bound = 1.0 / math.sqrt(in_dim)
        b = jax.random.uniform(kb, (num_classes,), dtype,
                               minval=-b_bound, maxval=b_bound)
    scales = jnp.ones((num_classes,), dtype) if learnable_scale else None
    return weight, b, scales


if __name__ == "__main__":
    key = jax.random.PRNGKey(0)
    k_x, k_p, k_x2, k_p2 = jax.random.split(key, 4)

    # --- small test: bias + learnable scale ---
    N, in_dim, num_classes = 8, 32, 16
    x = jax.random.normal(k_x, (N, in_dim), jnp.float32)
    weight, bias, scales = init_params(k_p, in_dim, num_classes,
                                       bias=True, learnable_scale=True)

    out = dot_product_classifier(x, weight, bias, scales)
    jax.block_until_ready(out)
    ref = (x @ weight.T + bias) * scales
    assert out.shape == (N, num_classes)
    assert jnp.allclose(out, ref, atol=1e-4, rtol=1e-4)

    # --- multi-tile test: exercises K accumulation + epilogue-gated bias (no scale) ---
    N2, in_dim2, C2 = 48, 384, 256
    x2 = jax.random.normal(k_x2, (N2, in_dim2), jnp.float32)
    w2, b2, _ = init_params(k_p2, in_dim2, C2, bias=True, learnable_scale=False)
    out2 = dot_product_classifier(x2, w2, b2, None, tm=16, tn=128, tk=128)
    jax.block_until_ready(out2)
    ref2 = x2 @ w2.T + b2
    assert out2.shape == (N2, C2)
    assert jnp.allclose(out2, ref2, atol=1e-4, rtol=1e-4)

    # --- no-bias / no-scale specialization ---
    out3 = dot_product_classifier(x, weight, None, None)
    jax.block_until_ready(out3)
    assert jnp.allclose(out3, x @ weight.T, atol=1e-4, rtol=1e-4)

    print("KERNEL_OK")
</pallas_src>

<mosaic_0001>
module attributes {stable_mosaic.version = 11 : i64} {
  func.func @_classifier_kernel(%arg0: i32, %arg1: i32, %arg2: i32, %arg3: memref<8x128xf32, #tpu.memory_space<vmem>>, %arg4: memref<128x128xf32, #tpu.memory_space<vmem>>, %arg5: memref<1x128xf32, #tpu.memory_space<vmem>>, %arg6: memref<1x128xf32, #tpu.memory_space<vmem>>, %arg7: memref<8x128xf32, #tpu.memory_space<vmem>>, %arg8: memref<8x128xf32, #tpu.memory_space<vmem>>) attributes {dimension_semantics = [#tpu.dimension_semantics<parallel>, #tpu.dimension_semantics<parallel>, #tpu.dimension_semantics<arbitrary>], iteration_bounds = array<i64: 1, 1, 1>, scalar_prefetch = 0 : i64, scratch_operands = 1 : i64, tpu.core_type = #tpu.core_type<tc>, window_params = [{transform_indices = @transform_0, window_bounds = array<i64: 8, 128>}, {transform_indices = @transform_1, window_bounds = array<i64: 128, 128>}, {transform_indices = @transform_2, window_bounds = array<i64: 1, 128>}, {transform_indices = @transform_3, window_bounds = array<i64: 1, 128>}, {transform_indices = @transform_4, window_bounds = array<i64: 8, 128>}]} {
    %c0_i32 = arith.constant 0 : i32
    %0 = arith.cmpi eq, %arg2, %c0_i32 : i32
    %1 = arith.extui %0 : i1 to i32
    %c0_i32_0 = arith.constant 0 : i32
    %2 = arith.cmpi ne, %1, %c0_i32_0 : i32
    scf.if %2 {
      %cst_10 = arith.constant 0.000000e+00 : f32
      %12 = vector.broadcast %cst_10 : f32 to vector<8x128xf32>
      %c0_11 = arith.constant 0 : index
      %c0_12 = arith.constant 0 : index
      %13 = vector.load %arg8[%c0_11, %c0_12] : memref<8x128xf32, #tpu.memory_space<vmem>>, vector<8x128xf32>
      tpu.vector_store %arg8[%c0_11, %c0_12], %12 {strides = array<i32>} : memref<8x128xf32, #tpu.memory_space<vmem>>, vector<8x128xf32>,
    } else {
    }
    %c0 = arith.constant 0 : index
    %c0_1 = arith.constant 0 : index
    %3 = vector.load %arg8[%c0, %c0_1] : memref<8x128xf32, #tpu.memory_space<vmem>>, vector<8x128xf32>
    %c0_2 = arith.constant 0 : index
    %c0_3 = arith.constant 0 : index
    %4 = vector.load %arg3[%c0_2, %c0_3] : memref<8x128xf32, #tpu.memory_space<vmem>>, vector<8x128xf32>
    %c0_4 = arith.constant 0 : index
    %c0_5 = arith.constant 0 : index
    %5 = vector.load %arg4[%c0_4, %c0_5] : memref<128x128xf32, #tpu.memory_space<vmem>>, vector<128x128xf32>
    %cst = arith.constant dense<0.000000e+00> : vector<8x128xf32>
    %6 = tpu.matmul %4, %5, %cst {dimension_numbers = #tpu.dot_dimension_numbers<[1], [1], [0], [0], [0, 0, 1, 0], [], []>} : vector<8x128xf32>, vector<128x128xf32>, vector<8x128xf32> -> vector<8x128xf32>
    %7 = arith.addf %3, %6 : vector<8x128xf32>
    %c0_6 = arith.constant 0 : index
    %c0_7 = arith.constant 0 : index
    %8 = vector.load %arg8[%c0_6, %c0_7] : memref<8x128xf32, #tpu.memory_space<vmem>>, vector<8x128xf32>
    tpu.vector_store %arg8[%c0_6, %c0_7], %7 {strides = array<i32>} : memref<8x128xf32, #tpu.memory_space<vmem>>, vector<8x128xf32>,
    %c0_i32_8 = arith.constant 0 : i32
    %9 = arith.cmpi eq, %arg2, %c0_i32_8 : i32
    %10 = arith.extui %9 : i1 to i32
    %c0_i32_9 = arith.constant 0 : i32
    %11 = arith.cmpi ne, %10, %c0_i32_9 : i32
    scf.if %11 {
      %c0_10 = arith.constant 0 : index
      %c0_11 = arith.constant 0 : index
      %12 = vector.load %arg8[%c0_10, %c0_11] : memref<8x128xf32, #tpu.memory_space<vmem>>, vector<8x128xf32>
      %c0_12 = arith.constant 0 : index
      %c0_13 = arith.constant 0 : index
      %13 = vector.load %arg5[%c0_12, %c0_13] : memref<1x128xf32, #tpu.memory_space<vmem>>, vector<1x128xf32>
      %14 = vector.broadcast %13 : vector<1x128xf32> to vector<8x128xf32>
      %15 = arith.addf %12, %14 : vector<8x128xf32>
      %c0_14 = arith.constant 0 : index
      %c0_15 = arith.constant 0 : index
      %16 = vector.load %arg6[%c0_14, %c0_15] : memref<1x128xf32, #tpu.memory_space<vmem>>, vector<1x128xf32>
      %17 = vector.broadcast %16 : vector<1x128xf32> to vector<8x128xf32>
      %18 = arith.mulf %15, %17 : vector<8x128xf32>
      %c0_16 = arith.constant 0 : index
      %c0_17 = arith.constant 0 : index
      %19 = vector.load %arg7[%c0_16, %c0_17] : memref<8x128xf32, #tpu.memory_space<vmem>>, vector<8x128xf32>
      tpu.vector_store %arg7[%c0_16, %c0_17], %18 {strides = array<i32>} : memref<8x128xf32, #tpu.memory_space<vmem>>, vector<8x128xf32>,
    } else {
    }
    return
  }
  func.func @transform_0(%arg0: i32, %arg1: i32, %arg2: i32) -> (i32, i32) {
    %c0_i32 = arith.constant 0 : i32
    return %arg0, %arg2 : i32, i32
  }
  func.func @transform_1(%arg0: i32, %arg1: i32, %arg2: i32) -> (i32, i32) {
    %c0_i32 = arith.constant 0 : i32
    return %arg1, %arg2 : i32, i32
  }
  func.func @transform_2(%arg0: i32, %arg1: i32, %arg2: i32) -> (i32, i32) {
    %c0_i32 = arith.constant 0 : i32
    %c0_i32_0 = arith.constant 0 : i32
    return %c0_i32, %arg1 : i32, i32
  }
  func.func @transform_3(%arg0: i32, %arg1: i32, %arg2: i32) -> (i32, i32) {
    %c0_i32 = arith.constant 0 : i32
    %c0_i32_0 = arith.constant 0 : i32
    return %c0_i32, %arg1 : i32, i32
  }
  func.func @transform_4(%arg0: i32, %arg1: i32, %arg2: i32) -> (i32, i32) {
    %c0_i32 = arith.constant 0 : i32
    return %arg0, %arg1 : i32, i32
  }
}

</mosaic_0001>

<llo_original>
// kernel: tpu_custom_call.1
$region0: #{tpu_custom_call.1}
  #allocation0 [shape = 'u32[]', space=smem, size = 0x4, offset = 0x4, fixed_abs, tag = 'smem constant byte address 0x4 - core index']
  #allocation1 [shape = 'u32[72,128]{1,0:T(1,128)}', space=vmem, size = 0x9000, scoped, tag = 'internal scratch']
  #allocation2 [shape = 'f32[8,128]{1,0:T(8,128)}', space=vmem, size = 0x1000, scoped, tag = 'scratch operand']
  %s0 = inlined_call_operand.hbm [shape: f32[8,128], index: 0, kind: input, shape index: {}]
  %s1 = inlined_call_operand.hbm [shape: f32[128,128], index: 1, kind: input, shape index: {}]
  %s2 = inlined_call_operand.vmem [shape: f32[1,128], index: 2, kind: input, shape index: {}]
  %s3 = inlined_call_operand.vmem [shape: f32[1,128], index: 3, kind: input, shape index: {}]
  %s4 = inlined_call_operand.hbm [shape: f32[8,128], index: 4, kind: output, shape index: {}]
  %s5 = sld [smem:[#allocation0]]
  $region42: #{tpu_custom_call.1} parent=0
    _
  %s7 = ssub.s32 1, %s5
  %s8 = scalar_select 0, %s7, %s5
  $region1: #{tpu_custom_call.1} parent=0
    #allocation3 [shape = 'u8[4096]{0}', space=vmem, size = 0x1000, scoped, tag = 'input window, operand 0, single buffered']
    #allocation4 [shape = 's32[1]{0}', space=sflag, size = 0x4, scoped, tag = 'scoped memory for tpu_custom_call.1']
    #allocation5 [shape = 's32[1]{0}', space=sflag, size = 0x4, scoped, tag = 'scoped memory for tpu_custom_call.1']
    #allocation6 [shape = 'u8[65536]{0}', space=vmem, size = 0x10000, scoped, tag = 'input window, operand 1, single buffered']
    #allocation7 [shape = 's32[1]{0}', space=sflag, size = 0x4, scoped, tag = 'scoped memory for tpu_custom_call.1']
    #allocation8 [shape = 'u8[4096]{0}', space=vmem, size = 0x1000, scoped, tag = 'output window, operand 0, single buffered']
    %9 = vsyncpa [#allocation4], 0
    %10 = vsyncpa [#allocation7], 0
    %11 = vsyncpa [#allocation5], 0
    // Predicated region
    $region2: #{tpu_custom_call.1} parent=1 // pred_check
      _
    $region3: #{tpu_custom_call.1} parent=1 // pred_check_branch
      %13 = sbr.rel (0) target = $region5
    $region4: #{tpu_custom_call.1} parent=1 // pred_region
      %15 = vsyncadd [#allocation4], 0
      %s17 = sshll.u32 %s0, 4
      %s18 = int_to_ptr.hbm [resolvable:$true] %s17
      %s19 = sshll.u32 [#allocation3], 4
      %s20 = int_to_ptr.vmem [resolvable:$true] %s19
      %22 = dma.hbm_to_vmem [thread:$0]  %s18, 128, %s20, [#allocation4]
    $region5: #{tpu_custom_call.1} parent=1 // pred_fallthru
      _
    // Predicated region
    $region6: #{tpu_custom_call.1} parent=1 // pred_check
      _
    $region7: #{tpu_custom_call.1} parent=1 // pred_check_branch
      %24 = sbr.rel (0) target = $region9
    $region8: #{tpu_custom_call.1} parent=1 // pred_region
      %26 = vsyncadd [#allocation7], 0
      %s27 = sshll.u32 %s1, 4
      %s28 = int_to_ptr.hbm [resolvable:$true] %s27
      %s29 = sshll.u32 [#allocation6], 4
      %s30 = int_to_ptr.vmem [resolvable:$true] %s29
      %35 = dma.hbm_to_vmem [thread:$0]  %s28, 2048, %s30, [#allocation7], 128, 128, 8
    $region9: #{tpu_custom_call.1} parent=1 // pred_fallthru
      _
    // Predicated region
    $region10: #{tpu_custom_call.1} parent=1 // pred_check
      _
    $region11: #{tpu_custom_call.1} parent=1 // pred_check_branch
      %37 = sbr.rel (0) target = $region13
    $region12: #{tpu_custom_call.1} parent=1 // pred_region
      _
    $region13: #{tpu_custom_call.1} parent=1 // pred_fallthru
      _
    // Predicated region
    $region14: #{tpu_custom_call.1} parent=1 // pred_check
      _
    $region15: #{tpu_custom_call.1} parent=1 // pred_check_branch
      %39 = sbr.rel (0) target = $region17
    $region16: #{tpu_custom_call.1} parent=1 // pred_region
      _
    $region17: #{tpu_custom_call.1} parent=1 // pred_fallthru
      _
    // Predicated region
    $region18: #{tpu_custom_call.1} parent=1 // pred_check
      _
    $region19: #{tpu_custom_call.1} parent=1 // pred_check_branch
      %41 = sbr.rel (0) target = $region21
    $region20: #{tpu_custom_call.1} parent=1 // pred_region
      %43 = dma.done [#allocation4], 128
    $region21: #{tpu_custom_call.1} parent=1 // pred_fallthru
      _
    // Predicated region
    $region22: #{tpu_custom_call.1} parent=1 // pred_check
      _
    $region23: #{tpu_custom_call.1} parent=1 // pred_check_branch
      %45 = sbr.rel (0) target = $region25
    $region24: #{tpu_custom_call.1} parent=1 // pred_region
      %47 = dma.done [#allocation7], 2048
    $region25: #{tpu_custom_call.1} parent=1 // pred_fallthru
      _
    %p48 = scmp.eq.s32.totalorder 0, 0
    // Predicated region
    $region26: #{tpu_custom_call.1} parent=1 // pred_check
      %p49 = pneg %p48
    $region27: #{tpu_custom_call.1} parent=1 // pred_check_branch
      %51 = sbr.rel (%p49) target = $region29
    $region28: #{tpu_custom_call.1} parent=1 // pred_region
      %52 = vst [vmem:[#allocation2] sm:$0xff] 0.0
    $region29: #{tpu_custom_call.1} parent=1 // pred_fallthru
      _
    %v53 = vld [vmem:[#allocation2] sm:$0xff]
    %v54 = vld [vmem:[#allocation3] sm:$0xff]
    %v55 = vld [vmem:[#allocation6] sm:$0xff]
    %v56 = vld [vmem:[#allocation6 + $0x8] sm:$0xff]
    %v57 = vld [vmem:[#allocation6 + $0x10] sm:$0xff]
    %v58 = vld [vmem:[#allocation6 + $0x18] sm:$0xff]
    %v59 = vld [vmem:[#allocation6 + $0x20] sm:$0xff]
    %v60 = vld [vmem:[#allocation6 + $0x28] sm:$0xff]
    %v61 = vld [vmem:[#allocation6 + $0x30] sm:$0xff]
    %v62 = vld [vmem:[#allocation6 + $0x38] sm:$0xff]
    %v63 = vld [vmem:[#allocation6 + $0x40] sm:$0xff]
    %v64 = vld [vmem:[#allocation6 + $0x48] sm:$0xff]
    %v65 = vld [vmem:[#allocation6 + $0x50] sm:$0xff]
    %v66 = vld [vmem:[#allocation6 + $0x58] sm:$0xff]
    %v67 = vld [vmem:[#allocation6 + $0x60] sm:$0xff]
    %v68 = vld [vmem:[#allocation6 + $0x68] sm:$0xff]
    %v69 = vld [vmem:[#allocation6 + $0x70] sm:$0xff]
    %v70 = vld [vmem:[#allocation6 + $0x78] sm:$0xff]
    %71 = vmatpush.xpose.msra.mxu0 %v70
    %72 = vmatpush.xpose.msra.mxu0 %v69
    %73 = vmatpush.xpose.msra.mxu0 %v68
    %74 = vmatpush.xpose.msra.mxu0 %v67
    %75 = vmatpush.xpose.msra.mxu0 %v66
    %76 = vmatpush.xpose.msra.mxu0 %v65
    %77 = vmatpush.xpose.msra.mxu0 %v64
    %78 = vmatpush.xpose.msra.mxu0 %v63
    %79 = vmatpush.xpose.msra.mxu0 %v62
    %80 = vmatpush.xpose.msra.mxu0 %v61
    %81 = vmatpush.xpose.msra.mxu0 %v60
    %82 = vmatpush.xpose.msra.mxu0 %v59
    %83 = vmatpush.xpose.msra.mxu0 %v58
    %84 = vmatpush.xpose.msra.mxu0 %v57
    %85 = vmatpush.xpose.msra.mxu0 %v56
    %86 = vmatpush.xpose.msra.mxu0 %v55
    %87 = vmatmul.f32.gmra.mxu0 %v54
    %v88 = vpop.f32.mrf.mxu0
    %v89 = vadd.f32 0.0, %v88
    %90 = vdwg.mxu0
    %v91 = vadd.f32 %v53, %v89
    %92 = vst [vmem:[#allocation2] sm:$0xff] %v91
    // Predicated region
    $region30: #{tpu_custom_call.1} parent=1 // pred_check
      %p93 = pneg %p48
    $region31: #{tpu_custom_call.1} parent=1 // pred_check_branch
      %95 = sbr.rel (%p93) target = $region33
    $region32: #{tpu_custom_call.1} parent=1 // pred_region
      %v96 = vld [vmem:[#allocation2] sm:$0xff]
      %v97 = vld [vmem:[%s2] sm:$0x1]
      %v99 = vperm.slane %v97, 0
      %v101 = vadd.f32 %v96, %v99
      %v102 = vld [vmem:[%s3] sm:$0x1]
      %v104 = vperm.slane %v102, 0
      %v106 = vmul.f32 %v101, %v104
      %107 = vst [vmem:[#allocation8] sm:$0xff] %v106
    $region33: #{tpu_custom_call.1} parent=1 // pred_fallthru
      _
    // Predicated region
    $region34: #{tpu_custom_call.1} parent=1 // pred_check
      _
    $region35: #{tpu_custom_call.1} parent=1 // pred_check_branch
      %109 = sbr.rel (0) target = $region37
    $region36: #{tpu_custom_call.1} parent=1 // pred_region
      %111 = vsyncadd [#allocation5], 0
      %s113 = sshll.u32 [#allocation8], 4
      %s114 = int_to_ptr.vmem [resolvable:$true] %s113
      %s115 = sshll.u32 %s4, 4
      %s116 = int_to_ptr.hbm [resolvable:$true] %s115
      %118 = dma.vmem_to_hbm [thread:$0]  %s114, 128, %s116, [#allocation5]
    $region37: #{tpu_custom_call.1} parent=1 // pred_fallthru
      _
    // Predicated region
    $region38: #{tpu_custom_call.1} parent=1 // pred_check
      _
    $region39: #{tpu_custom_call.1} parent=1 // pred_check_branch
      %120 = sbr.rel (0) target = $region41
    $region40: #{tpu_custom_call.1} parent=1 // pred_region
      %122 = dma.done [#allocation5], 128
    $region41: #{tpu_custom_call.1} parent=1 // pred_fallthru
      _
    %123 = vsyncpa [#allocation4], 1
    %124 = vsyncpa [#allocation7], 1
    %125 = vsyncpa [#allocation5], 1

</llo_original>
